<compile_context>
chip_gen: v5e
topology: v5e:2x2
jax: 0.10.0
libtpu: 0.0.40
codegen_flags: <defaults>
</compile_context>

<pallas_src>
import jax
import jax.numpy as jnp
import numpy as np
from jax.experimental import pallas as pl
from jax.experimental.pallas import tpu as pltpu

C1, C2, H, OUT = 32, 64, 64, 2
OUT_PAD = 128          # lane-dense fc2 output width (sliced to OUT in wrapper)
EPS = 1e-5


def _cnn_kernel(x_ref, w1_ref, t1_ref, w2_ref, t2_ref,
                wf1_ref, bf1_ref, wf2_ref, bf2_ref,
                out_ref, pad_scr, h2_scr):
    """Fused forward pass.  Rows of x_ref are (position l, batch b) pairs
    ordered r = l*B + b, so L*B is the MXU M dimension for both convs."""
    LB = x_ref.shape[0]
    B = out_ref.shape[0]
    L = LB // B
    Lh = L // 2

    # conv1 (3 taps pre-stacked on lanes by the wrapper) + bias + BN1 + ReLU
    h1 = jnp.dot(x_ref[...], w1_ref[...], preferred_element_type=jnp.float32)
    h1 = jnp.maximum(h1 + t1_ref[...], 0.0)                       # (L*B, C1)

    # conv2: three shifted views via a zero-padded scratch (zero border ==
    # padding=1); stack them on lanes and do one matmul over K = 3*C1.
    pad_scr[...] = jnp.zeros_like(pad_scr)
    pad_scr[B:B + LB, :] = h1
    h1_taps = jnp.concatenate(
        [pad_scr[0:LB, :],                     # position l-1 (tap k=0)
         h1,                                   # position l   (tap k=1)
         pad_scr[2 * B:2 * B + LB, :]],        # position l+1 (tap k=2)
        axis=1)                                                    # (L*B, 3*C1)
    h2 = jnp.dot(h1_taps, w2_ref[...], preferred_element_type=jnp.float32)
    h2 = jnp.maximum(h2 + t2_ref[...], 0.0)                       # (L*B, C2)
    h2_scr[...] = h2

    # MaxPool1d(2) + flatten: positions (2m, 2m+1) are adjacent B-row blocks;
    # max them and lay the Lh pooled blocks out along lanes -> (B, Lh*C2),
    # which is the fc1 input (fc1 weight pre-permuted to lane order m*C2 + c).
    blocks = []
    for m in range(Lh):
        even = h2_scr[(2 * m) * B:(2 * m + 1) * B, :]
        odd = h2_scr[(2 * m + 1) * B:(2 * m + 2) * B, :]
        blocks.append(jnp.maximum(even, odd))
    pooled = jnp.concatenate(blocks, axis=1)                      # (B, Lh*C2)

    # fc1 + ReLU   (dropout p=0.2 is identity in eval mode)
    f1 = jnp.dot(pooled, wf1_ref[...], preferred_element_type=jnp.float32)
    f1 = jnp.maximum(f1 + bf1_ref[...], 0.0)                      # (B, H)

    # fc2 -- zero-padded to 128 lanes so the single store is lane-dense.
    out_ref[...] = jnp.dot(f1, wf2_ref[...],
                           preferred_element_type=jnp.float32) + bf2_ref[...]


def init_params(key, input_channels, sequence_length):
    """Deterministic synthetic parameters with PyTorch-module shapes."""
    Lh = sequence_length // 2
    flatten = C2 * Lh
    ks = jax.random.split(key, 8)

    def u(k, shape, fan_in):
        bound = 1.0 / np.sqrt(fan_in)
        return jax.random.uniform(k, shape, jnp.float32, -bound, bound)

    return {
        "conv1_w": u(ks[0], (C1, input_channels, 3), input_channels * 3),
        "conv1_b": u(ks[1], (C1,), input_channels * 3),
        "conv2_w": u(ks[2], (C2, C1, 3), C1 * 3),
        "conv2_b": u(ks[3], (C2,), C1 * 3),
        "fc1_w": u(ks[4], (H, flatten), flatten),
        "fc1_b": u(ks[5], (H,), flatten),
        "fc2_w": u(ks[6], (OUT, H), H),
        "fc2_b": u(ks[7], (OUT,), H),
        # BatchNorm1d defaults (fresh module, eval mode)
        "bn1_gamma": jnp.ones((C1,), jnp.float32),
        "bn1_beta": jnp.zeros((C1,), jnp.float32),
        "bn1_mean": jnp.zeros((C1,), jnp.float32),
        "bn1_var": jnp.ones((C1,), jnp.float32),
        "bn2_gamma": jnp.ones((C2,), jnp.float32),
        "bn2_beta": jnp.zeros((C2,), jnp.float32),
        "bn2_mean": jnp.zeros((C2,), jnp.float32),
        "bn2_var": jnp.ones((C2,), jnp.float32),
    }


def prepare_params(params):
    """One-time precompute (hoisted out of forward()): fold conv biases and
    eval-mode BatchNorm into tap-form weights, permute/pad the fc weights."""
    scale1 = params["bn1_gamma"] / jnp.sqrt(params["bn1_var"] + EPS)
    shift1 = params["bn1_beta"] - params["bn1_mean"] * scale1
    scale2 = params["bn2_gamma"] / jnp.sqrt(params["bn2_var"] + EPS)
    shift2 = params["bn2_beta"] - params["bn2_mean"] * scale2

    c_in = params["conv1_w"].shape[1]
    flat = params["fc1_w"].shape[1]
    Lh = flat // C2

    # Tap weights: row index k*C + c pairs with the lane-stacked shifted views
    # (k=0 <-> position l-1, k=1 <-> l, k=2 <-> l+1).
    w1 = jnp.transpose(params["conv1_w"], (2, 1, 0)).reshape(3 * c_in, C1)
    w1 = w1 * scale1[None, :]
    t1 = (params["conv1_b"] * scale1 + shift1).reshape(1, C1)

    w2 = jnp.transpose(params["conv2_w"], (2, 1, 0)).reshape(3 * C1, C2)
    w2 = w2 * scale2[None, :]
    t2 = (params["conv2_b"] * scale2 + shift2).reshape(1, C2)

    # fc1: kernel flatten lane order is m*C2 + c; PyTorch order is c*Lh + m.
    wf1 = jnp.transpose(params["fc1_w"].reshape(H, C2, Lh), (2, 1, 0))
    wf1 = wf1.reshape(Lh * C2, H)
    bf1 = params["fc1_b"].reshape(1, H)

    # fc2: zero-pad N from 2 to 128 lanes (lane-dense output store).
    wf2 = jnp.zeros((H, OUT_PAD), jnp.float32).at[:, :OUT].set(params["fc2_w"].T)
    bf2 = jnp.zeros((1, OUT_PAD), jnp.float32).at[:, :OUT].set(params["fc2_b"])

    return dict(w1=w1, t1=t1, w2=w2, t2=t2, wf1=wf1, bf1=bf1, wf2=wf2, bf2=bf2)


def forward(prep, x_ncl):
    """Eval-mode forward pass (running BN stats, dropout = identity)."""
    B, c_in, L = x_ncl.shape
    assert L % 2 == 0, "MaxPool1d(2) with odd L (trailing element dropped) unsupported"
    Lh = L // 2
    LB = L * B

    # (B, C_in, L) -> rows ordered (l, b); build the three shifted views
    # (padding=1) in the wrapper and stack them on lanes (width-3 im2col).
    x_lbc = jnp.transpose(x_ncl, (2, 0, 1)).astype(jnp.float32)    # (L, B, C_in)
    x_pad = jnp.pad(x_lbc, ((1, 1), (0, 0), (0, 0)))
    x_taps = jnp.concatenate(
        [x_pad[0:L], x_lbc, x_pad[2:L + 2]], axis=-1).reshape(LB, 3 * c_in)

    flops = 2 * (LB * 3 * c_in * C1 + LB * 3 * C1 * C2
                 + B * Lh * C2 * H + B * H * OUT_PAD)
    bytes_accessed = 4 * (x_taps.size + prep["w1"].size + prep["w2"].size
                          + prep["wf1"].size + prep["wf2"].size
                          + C1 + C2 + H + OUT_PAD + B * OUT_PAD)

    vmem = pl.BlockSpec(memory_space=pltpu.MemorySpace.VMEM)
    out_pad = pl.pallas_call(
        _cnn_kernel,
        out_shape=jax.ShapeDtypeStruct((B, OUT_PAD), jnp.float32),
        in_specs=[vmem] * 9,
        out_specs=vmem,
        scratch_shapes=[pltpu.VMEM(((L + 2) * B, C1), jnp.float32),   # padded h1
                        pltpu.VMEM((LB, C2), jnp.float32)],           # h2
        compiler_params=pltpu.CompilerParams(vmem_limit_bytes=32 * 1024 * 1024),
        cost_estimate=pl.CostEstimate(flops=flops, transcendentals=0,
                                      bytes_accessed=bytes_accessed),
    )(x_taps, prep["w1"], prep["t1"], prep["w2"], prep["t2"],
      prep["wf1"], prep["bf1"], prep["wf2"], prep["bf2"])
    return out_pad[:, :OUT]


def reference(params, x_ncl):
    """Pure-JAX reference mirroring the PyTorch forward (eval mode)."""
    B, _, L = x_ncl.shape

    def conv_bn_relu(x, w, b, gamma, beta, mean, var):
        y = jax.lax.conv_general_dilated(
            x, w, window_strides=(1,), padding=((1, 1),),
            dimension_numbers=("NCH", "OIH", "NCH"))
        y = y + b[None, :, None]
        y = (y - mean[None, :, None]) / jnp.sqrt(var[None, :, None] + EPS)
        y = y * gamma[None, :, None] + beta[None, :, None]
        return jnp.maximum(y, 0.0)

    y = conv_bn_relu(x_ncl, params["conv1_w"], params["conv1_b"],
                     params["bn1_gamma"], params["bn1_beta"],
                     params["bn1_mean"], params["bn1_var"])
    y = conv_bn_relu(y, params["conv2_w"], params["conv2_b"],
                     params["bn2_gamma"], params["bn2_beta"],
                     params["bn2_mean"], params["bn2_var"])
    y = y.reshape(B, C2, L // 2, 2).max(axis=-1)                   # MaxPool1d(2)
    flat = y.reshape(B, -1)
    f1 = jnp.maximum(flat @ params["fc1_w"].T + params["fc1_b"], 0.0)
    return f1 @ params["fc2_w"].T + params["fc2_b"]


if __name__ == "__main__":
    key = jax.random.PRNGKey(0)
    k_params, k_x = jax.random.split(key)

    B, C_in, L = 2, 4, 16          # batch=2, input_channels=4, sequence_length=16
    params = init_params(k_params, C_in, L)
    x = jax.random.normal(k_x, (B, C_in, L), jnp.float32)

    prep = prepare_params(params)  # one-time weight folding (hoisted from forward)
    out = forward(prep, x)
    out = jax.block_until_ready(out)

    ref = reference(params, x)
    np.testing.assert_allclose(np.asarray(out), np.asarray(ref),
                               rtol=1e-4, atol=1e-4)
    print("KERNEL_OK")
</pallas_src>

<mosaic_0001>
module attributes {stable_mosaic.version = 11 : i64} {
  func.func @_cnn_kernel(%arg0: memref<32x12xf32, #tpu.memory_space<vmem>>, %arg1: memref<12x32xf32, #tpu.memory_space<vmem>>, %arg2: memref<1x32xf32, #tpu.memory_space<vmem>>, %arg3: memref<96x64xf32, #tpu.memory_space<vmem>>, %arg4: memref<1x64xf32, #tpu.memory_space<vmem>>, %arg5: memref<512x64xf32, #tpu.memory_space<vmem>>, %arg6: memref<1x64xf32, #tpu.memory_space<vmem>>, %arg7: memref<64x128xf32, #tpu.memory_space<vmem>>, %arg8: memref<1x128xf32, #tpu.memory_space<vmem>>, %arg9: memref<2x128xf32, #tpu.memory_space<vmem>>, %arg10: memref<36x32xf32, #tpu.memory_space<vmem>>, %arg11: memref<32x64xf32, #tpu.memory_space<vmem>>) attributes {dimension_semantics = [], scalar_prefetch = 0 : i64, scratch_operands = 2 : i64, tpu.core_type = #tpu.core_type<tc>} {
    %c0 = arith.constant 0 : index
    %c0_0 = arith.constant 0 : index
    %0 = vector.load %arg0[%c0, %c0_0] : memref<32x12xf32, #tpu.memory_space<vmem>>, vector<32x12xf32>
    %c0_1 = arith.constant 0 : index
    %c0_2 = arith.constant 0 : index
    %1 = vector.load %arg1[%c0_1, %c0_2] : memref<12x32xf32, #tpu.memory_space<vmem>>, vector<12x32xf32>
    %cst = arith.constant dense<0.000000e+00> : vector<32x32xf32>
    %2 = tpu.matmul %0, %1, %cst {dimension_numbers = #tpu.dot_dimension_numbers<[1], [0], [0], [1], [0, 0, 1, 1], [], []>} : vector<32x12xf32>, vector<12x32xf32>, vector<32x32xf32> -> vector<32x32xf32>
    %c0_3 = arith.constant 0 : index
    %c0_4 = arith.constant 0 : index
    %3 = vector.load %arg2[%c0_3, %c0_4] : memref<1x32xf32, #tpu.memory_space<vmem>>, vector<1x32xf32>
    %4 = vector.broadcast %3 : vector<1x32xf32> to vector<32x32xf32>
    %5 = arith.addf %2, %4 : vector<32x32xf32>
    %cst_5 = arith.constant 0.000000e+00 : f32
    %6 = vector.broadcast %cst_5 : f32 to vector<32x32xf32>
    %7 = arith.maximumf %5, %6 : vector<32x32xf32>
    %cst_6 = arith.constant 0.000000e+00 : f32
    %8 = vector.broadcast %cst_6 : f32 to vector<36x32xf32>
    %c0_7 = arith.constant 0 : index
    %c0_8 = arith.constant 0 : index
    %9 = vector.load %arg10[%c0_7, %c0_8] : memref<36x32xf32, #tpu.memory_space<vmem>>, vector<36x32xf32>
    tpu.vector_store %arg10[%c0_7, %c0_8], %8 {strides = array<i32>} : memref<36x32xf32, #tpu.memory_space<vmem>>, vector<36x32xf32>,
    %c2 = arith.constant 2 : index
    %c0_9 = arith.constant 0 : index
    %10 = vector.load %arg10[%c2, %c0_9] : memref<36x32xf32, #tpu.memory_space<vmem>>, vector<32x32xf32>
    tpu.vector_store %arg10[%c2, %c0_9], %7 {strides = array<i32>} : memref<36x32xf32, #tpu.memory_space<vmem>>, vector<32x32xf32>,
    %c0_10 = arith.constant 0 : index
    %c0_11 = arith.constant 0 : index
    %11 = vector.load %arg10[%c0_10, %c0_11] : memref<36x32xf32, #tpu.memory_space<vmem>>, vector<32x32xf32>
    %c4 = arith.constant 4 : index
    %c0_12 = arith.constant 0 : index
    %12 = vector.load %arg10[%c4, %c0_12] : memref<36x32xf32, #tpu.memory_space<vmem>>, vector<32x32xf32>
    %13 = tpu.concatenate %11, %7, %12 in 1 : vector<32x32xf32>, vector<32x32xf32>, vector<32x32xf32> -> vector<32x96xf32>
    %c0_13 = arith.constant 0 : index
    %c0_14 = arith.constant 0 : index
    %14 = vector.load %arg3[%c0_13, %c0_14] : memref<96x64xf32, #tpu.memory_space<vmem>>, vector<96x64xf32>
    %cst_15 = arith.constant dense<0.000000e+00> : vector<32x64xf32>
    %15 = tpu.matmul %13, %14, %cst_15 {dimension_numbers = #tpu.dot_dimension_numbers<[1], [0], [0], [1], [0, 0, 1, 1], [], []>} : vector<32x96xf32>, vector<96x64xf32>, vector<32x64xf32> -> vector<32x64xf32>
    %c0_16 = arith.constant 0 : index
    %c0_17 = arith.constant 0 : index
    %16 = vector.load %arg4[%c0_16, %c0_17] : memref<1x64xf32, #tpu.memory_space<vmem>>, vector<1x64xf32>
    %17 = vector.broadcast %16 : vector<1x64xf32> to vector<32x64xf32>
    %18 = arith.addf %15, %17 : vector<32x64xf32>
    %cst_18 = arith.constant 0.000000e+00 : f32
    %19 = vector.broadcast %cst_18 : f32 to vector<32x64xf32>
    %20 = arith.maximumf %18, %19 : vector<32x64xf32>
    %c0_19 = arith.constant 0 : index
    %c0_20 = arith.constant 0 : index
    %21 = vector.load %arg11[%c0_19, %c0_20] : memref<32x64xf32, #tpu.memory_space<vmem>>, vector<32x64xf32>
    tpu.vector_store %arg11[%c0_19, %c0_20], %20 {strides = array<i32>} : memref<32x64xf32, #tpu.memory_space<vmem>>, vector<32x64xf32>,
    %c0_21 = arith.constant 0 : index
    %c0_22 = arith.constant 0 : index
    %22 = vector.load %arg11[%c0_21, %c0_22] : memref<32x64xf32, #tpu.memory_space<vmem>>, vector<2x64xf32>
    %c2_23 = arith.constant 2 : index
    %c0_24 = arith.constant 0 : index
    %23 = vector.load %arg11[%c2_23, %c0_24] : memref<32x64xf32, #tpu.memory_space<vmem>>, vector<2x64xf32>
    %24 = arith.maximumf %22, %23 : vector<2x64xf32>
    %c4_25 = arith.constant 4 : index
    %c0_26 = arith.constant 0 : index
    %25 = vector.load %arg11[%c4_25, %c0_26] : memref<32x64xf32, #tpu.memory_space<vmem>>, vector<2x64xf32>
    %c6 = arith.constant 6 : index
    %c0_27 = arith.constant 0 : index
    %26 = vector.load %arg11[%c6, %c0_27] : memref<32x64xf32, #tpu.memory_space<vmem>>, vector<2x64xf32>
    %27 = arith.maximumf %25, %26 : vector<2x64xf32>
    %c8 = arith.constant 8 : index
    %c0_28 = arith.constant 0 : index
    %28 = vector.load %arg11[%c8, %c0_28] : memref<32x64xf32, #tpu.memory_space<vmem>>, vector<2x64xf32>
    %c10 = arith.constant 10 : index
    %c0_29 = arith.constant 0 : index
    %29 = vector.load %arg11[%c10, %c0_29] : memref<32x64xf32, #tpu.memory_space<vmem>>, vector<2x64xf32>
    %30 = arith.maximumf %28, %29 : vector<2x64xf32>
    %c12 = arith.constant 12 : index
    %c0_30 = arith.constant 0 : index
    %31 = vector.load %arg11[%c12, %c0_30] : memref<32x64xf32, #tpu.memory_space<vmem>>, vector<2x64xf32>
    %c14 = arith.constant 14 : index
    %c0_31 = arith.constant 0 : index
    %32 = vector.load %arg11[%c14, %c0_31] : memref<32x64xf32, #tpu.memory_space<vmem>>, vector<2x64xf32>
    %33 = arith.maximumf %31, %32 : vector<2x64xf32>
    %c16 = arith.constant 16 : index
    %c0_32 = arith.constant 0 : index
    %34 = vector.load %arg11[%c16, %c0_32] : memref<32x64xf32, #tpu.memory_space<vmem>>, vector<2x64xf32>
    %c18 = arith.constant 18 : index
    %c0_33 = arith.constant 0 : index
    %35 = vector.load %arg11[%c18, %c0_33] : memref<32x64xf32, #tpu.memory_space<vmem>>, vector<2x64xf32>
    %36 = arith.maximumf %34, %35 : vector<2x64xf32>
    %c20 = arith.constant 20 : index
    %c0_34 = arith.constant 0 : index
    %37 = vector.load %arg11[%c20, %c0_34] : memref<32x64xf32, #tpu.memory_space<vmem>>, vector<2x64xf32>
    %c22 = arith.constant 22 : index
    %c0_35 = arith.constant 0 : index
    %38 = vector.load %arg11[%c22, %c0_35] : memref<32x64xf32, #tpu.memory_space<vmem>>, vector<2x64xf32>
    %39 = arith.maximumf %37, %38 : vector<2x64xf32>
    %c24 = arith.constant 24 : index
    %c0_36 = arith.constant 0 : index
    %40 = vector.load %arg11[%c24, %c0_36] : memref<32x64xf32, #tpu.memory_space<vmem>>, vector<2x64xf32>
    %c26 = arith.constant 26 : index
    %c0_37 = arith.constant 0 : index
    %41 = vector.load %arg11[%c26, %c0_37] : memref<32x64xf32, #tpu.memory_space<vmem>>, vector<2x64xf32>
    %42 = arith.maximumf %40, %41 : vector<2x64xf32>
    %c28 = arith.constant 28 : index
    %c0_38 = arith.constant 0 : index
    %43 = vector.load %arg11[%c28, %c0_38] : memref<32x64xf32, #tpu.memory_space<vmem>>, vector<2x64xf32>
    %c30 = arith.constant 30 : index
    %c0_39 = arith.constant 0 : index
    %44 = vector.load %arg11[%c30, %c0_39] : memref<32x64xf32, #tpu.memory_space<vmem>>, vector<2x64xf32>
    %45 = arith.maximumf %43, %44 : vector<2x64xf32>
    %46 = tpu.concatenate %24, %27, %30, %33, %36, %39, %42, %45 in 1 : vector<2x64xf32>, vector<2x64xf32>, vector<2x64xf32>, vector<2x64xf32>, vector<2x64xf32>, vector<2x64xf32>, vector<2x64xf32>, vector<2x64xf32> -> vector<2x512xf32>
    %c0_40 = arith.constant 0 : index
    %c0_41 = arith.constant 0 : index
    %47 = vector.load %arg5[%c0_40, %c0_41] : memref<512x64xf32, #tpu.memory_space<vmem>>, vector<512x64xf32>
    %cst_42 = arith.constant dense<0.000000e+00> : vector<2x64xf32>
    %48 = tpu.matmul %46, %47, %cst_42 {dimension_numbers = #tpu.dot_dimension_numbers<[1], [0], [0], [1], [0, 0, 1, 1], [], []>} : vector<2x512xf32>, vector<512x64xf32>, vector<2x64xf32> -> vector<2x64xf32>
    %c0_43 = arith.constant 0 : index
    %c0_44 = arith.constant 0 : index
    %49 = vector.load %arg6[%c0_43, %c0_44] : memref<1x64xf32, #tpu.memory_space<vmem>>, vector<1x64xf32>
    %50 = vector.broadcast %49 : vector<1x64xf32> to vector<2x64xf32>
    %51 = arith.addf %48, %50 : vector<2x64xf32>
    %cst_45 = arith.constant 0.000000e+00 : f32
    %52 = vector.broadcast %cst_45 : f32 to vector<2x64xf32>
    %53 = arith.maximumf %51, %52 : vector<2x64xf32>
    %c0_46 = arith.constant 0 : index
    %c0_47 = arith.constant 0 : index
    %54 = vector.load %arg7[%c0_46, %c0_47] : memref<64x128xf32, #tpu.memory_space<vmem>>, vector<64x128xf32>
    %cst_48 = arith.constant dense<0.000000e+00> : vector<2x128xf32>
    %55 = tpu.matmul %53, %54, %cst_48 {dimension_numbers = #tpu.dot_dimension_numbers<[1], [0], [0], [1], [0, 0, 1, 1], [], []>} : vector<2x64xf32>, vector<64x128xf32>, vector<2x128xf32> -> vector<2x128xf32>
    %c0_49 = arith.constant 0 : index
    %c0_50 = arith.constant 0 : index
    %56 = vector.load %arg8[%c0_49, %c0_50] : memref<1x128xf32, #tpu.memory_space<vmem>>, vector<1x128xf32>
    %57 = vector.broadcast %56 : vector<1x128xf32> to vector<2x128xf32>
    %58 = arith.addf %55, %57 : vector<2x128xf32>
    %c0_51 = arith.constant 0 : index
    %c0_52 = arith.constant 0 : index
    %59 = vector.load %arg9[%c0_51, %c0_52] : memref<2x128xf32, #tpu.memory_space<vmem>>, vector<2x128xf32>
    tpu.vector_store %arg9[%c0_51, %c0_52], %58 {strides = array<i32>} : memref<2x128xf32, #tpu.memory_space<vmem>>, vector<2x128xf32>,
    return
  }
}

</mosaic_0001>

<llo_original>
// kernel: tpu_custom_call.1
$region0: #{tpu_custom_call.1}
  #allocation0 [shape = 'u32[]', space=smem, size = 0x4, offset = 0x4, fixed_abs, tag = 'smem constant byte address 0x4 - core index']
  #allocation1 [shape = 'u32[72,128]{1,0:T(1,128)}', space=vmem, size = 0x9000, scoped, tag = 'internal scratch']
  #allocation2 [shape = 'f32[36,32]{1,0:T(8,128)}', space=vmem, size = 0x5000, scoped, tag = 'scratch operand']
  #allocation3 [shape = 'f32[32,64]{1,0:T(8,128)}', space=vmem, size = 0x4000, scoped, tag = 'scratch operand']
  %s0 = inlined_call_operand.vmem [shape: f32[32,12], index: 0, kind: input, shape index: {}]
  %s1 = inlined_call_operand.vmem [shape: f32[12,32], index: 1, kind: input, shape index: {}]
  %s2 = inlined_call_operand.vmem [shape: f32[1,32], index: 2, kind: input, shape index: {}]
  %s3 = inlined_call_operand.vmem [shape: f32[96,64], index: 3, kind: input, shape index: {}]
  %s4 = inlined_call_operand.vmem [shape: f32[1,64], index: 4, kind: input, shape index: {}]
  %s5 = inlined_call_operand.vmem [shape: f32[512,64], index: 5, kind: input, shape index: {}]
  %s6 = inlined_call_operand.vmem [shape: f32[1,64], index: 6, kind: input, shape index: {}]
  %s7 = inlined_call_operand.vmem [shape: f32[64,128], index: 7, kind: input, shape index: {}]
  %s8 = inlined_call_operand.vmem [shape: f32[1,128], index: 8, kind: input, shape index: {}]
  %s9 = inlined_call_operand.hbm [shape: f32[2,128], index: 9, kind: output, shape index: {}]
  %s10 = sld [smem:[#allocation0]]
  $region46: #{tpu_custom_call.1} parent=0
    _
  %s12 = ssub.s32 1, %s10
  %s13 = scalar_select 0, %s12, %s10
  $region1: #{tpu_custom_call.1} parent=0
    #allocation4 [shape = 'u8[1024]{0}', space=vmem, size = 0x400, scoped, tag = 'output window, operand 0, single buffered']
    #allocation5 [shape = 's32[1]{0}', space=sflag, size = 0x4, scoped, tag = 'scoped memory for tpu_custom_call.1']
    %14 = vsyncpa [#allocation5], 0
    // Predicated region
    $region2: #{tpu_custom_call.1} parent=1 // pred_check
      _
    $region3: #{tpu_custom_call.1} parent=1 // pred_check_branch
      %16 = sbr.rel (0) target = $region5
    $region4: #{tpu_custom_call.1} parent=1 // pred_region
      _
    $region5: #{tpu_custom_call.1} parent=1 // pred_fallthru
      _
    // Predicated region
    $region6: #{tpu_custom_call.1} parent=1 // pred_check
      _
    $region7: #{tpu_custom_call.1} parent=1 // pred_check_branch
      %18 = sbr.rel (0) target = $region9
    $region8: #{tpu_custom_call.1} parent=1 // pred_region
      _
    $region9: #{tpu_custom_call.1} parent=1 // pred_fallthru
      _
    // Predicated region
    $region10: #{tpu_custom_call.1} parent=1 // pred_check
      _
    $region11: #{tpu_custom_call.1} parent=1 // pred_check_branch
      %20 = sbr.rel (0) target = $region13
    $region12: #{tpu_custom_call.1} parent=1 // pred_region
      _
    $region13: #{tpu_custom_call.1} parent=1 // pred_fallthru
      _
    // Predicated region
    $region14: #{tpu_custom_call.1} parent=1 // pred_check
      _
    $region15: #{tpu_custom_call.1} parent=1 // pred_check_branch
      %22 = sbr.rel (0) target = $region17
    $region16: #{tpu_custom_call.1} parent=1 // pred_region
      _
    $region17: #{tpu_custom_call.1} parent=1 // pred_fallthru
      _
    // Predicated region
    $region18: #{tpu_custom_call.1} parent=1 // pred_check
      _
    $region19: #{tpu_custom_call.1} parent=1 // pred_check_branch
      %24 = sbr.rel (0) target = $region21
    $region20: #{tpu_custom_call.1} parent=1 // pred_region
      _
    $region21: #{tpu_custom_call.1} parent=1 // pred_fallthru
      _
    // Predicated region
    $region22: #{tpu_custom_call.1} parent=1 // pred_check
      _
    $region23: #{tpu_custom_call.1} parent=1 // pred_check_branch
      %26 = sbr.rel (0) target = $region25
    $region24: #{tpu_custom_call.1} parent=1 // pred_region
      _
    $region25: #{tpu_custom_call.1} parent=1 // pred_fallthru
      _
    // Predicated region
    $region26: #{tpu_custom_call.1} parent=1 // pred_check
      _
    $region27: #{tpu_custom_call.1} parent=1 // pred_check_branch
      %28 = sbr.rel (0) target = $region29
    $region28: #{tpu_custom_call.1} parent=1 // pred_region
      _
    $region29: #{tpu_custom_call.1} parent=1 // pred_fallthru
      _
    // Predicated region
    $region30: #{tpu_custom_call.1} parent=1 // pred_check
      _
    $region31: #{tpu_custom_call.1} parent=1 // pred_check_branch
      %30 = sbr.rel (0) target = $region33
    $region32: #{tpu_custom_call.1} parent=1 // pred_region
      _
    $region33: #{tpu_custom_call.1} parent=1 // pred_fallthru
      _
    // Predicated region
    $region34: #{tpu_custom_call.1} parent=1 // pred_check
      _
    $region35: #{tpu_custom_call.1} parent=1 // pred_check_branch
      %32 = sbr.rel (0) target = $region37
    $region36: #{tpu_custom_call.1} parent=1 // pred_region
      _
    $region37: #{tpu_custom_call.1} parent=1 // pred_fallthru
      _
    %v33 = vld [vmem:[%s0] sm:$0xff]
    %v34 = vld [vmem:[%s0 + $0x8] sm:$0xff]
    %v35 = vld [vmem:[%s0 + $0x10] sm:$0xff]
    %v36 = vld [vmem:[%s0 + $0x18] sm:$0xff]
    %v37 = vld [vmem:[%s1] sm:$0xff]
    %v38 = vld [vmem:[%s1 + $0x8] sm:$0xf]
    %v39 = vld [vmem:[%s2] sm:$0x1]
    %v41 = vperm.slane %v39, 0
    %vm43 = vcmask 97280
    %v45 = vsel %vm43, %v33, 0
    %v48 = vsel %vm43, %v34, 0
    %v51 = vsel %vm43, %v35, 0
    %v54 = vsel %vm43, %v36, 0
    %vm56 = vcmask 1043456
    %v58 = vsel %vm56, %v38, 0
    %60 = vmatpush.msra.mxu0 0.0
    %61 = vmatpush.msra.mxu0 0.0
    %62 = vmatpush.msra.mxu0 0.0
    %63 = vmatpush.msra.mxu0 0.0
    %64 = vmatpush.msra.mxu0 0.0
    %65 = vmatpush.msra.mxu0 0.0
    %66 = vmatpush.msra.mxu0 0.0
    %67 = vmatpush.msra.mxu0 0.0
    %68 = vmatpush.msra.mxu0 0.0
    %69 = vmatpush.msra.mxu0 0.0
    %70 = vmatpush.msra.mxu0 0.0
    %71 = vmatpush.msra.mxu0 0.0
    %72 = vmatpush.msra.mxu0 0.0
    %73 = vmatpush.msra.mxu0 0.0
    %74 = vmatpush.msra.mxu0 %v58
    %75 = vmatpush.msra.mxu0 %v37
    %76 = vmatmul.f32.gmra.mxu0 %v45
    %v77 = vpop.f32.mrf.mxu0
    %v78 = vadd.f32 %v41, %v77
    %79 = vmatmul.f32.gmra.mxu0 %v48
    %v80 = vpop.f32.mrf.mxu0
    %v81 = vadd.f32 %v41, %v80
    %82 = vmatmul.f32.gmra.mxu0 %v51
    %v83 = vpop.f32.mrf.mxu0
    %v84 = vadd.f32 %v41, %v83
    %85 = vmatmul.f32.gmra.mxu0 %v54
    %v86 = vpop.f32.mrf.mxu0
    %v87 = vadd.f32 %v41, %v86
    %88 = vdwg.mxu0
    %v89 = vmax.f32 %v78, 0.0
    %v90 = vmax.f32 %v81, 0.0
    %v91 = vmax.f32 %v84, 0.0
    %v92 = vmax.f32 %v87, 0.0
    %vm93 = vcmask 261120
    %94 = vst.msk [vmem:[#allocation2] sm:$0xff] %vm93, 0.0
    %95 = vst.msk [vmem:[#allocation2 + $0x8] sm:$0xff] %vm93, 0.0
    %96 = vst.msk [vmem:[#allocation2 + $0x10] sm:$0xff] %vm93, 0.0
    %97 = vst.msk [vmem:[#allocation2 + $0x18] sm:$0xff] %vm93, 0.0
    %vm98 = vcmask 257024
    %99 = vst.msk [vmem:[#allocation2 + $0x20] sm:$0xf] %vm98, 0.0
    %100 = vst.msk [vmem:[#allocation2 + $0x2] sm:$0xff] %vm93, %v89
    %101 = vst.msk [vmem:[#allocation2 + $0xa] sm:$0xff] %vm93, %v90
    %102 = vst.msk [vmem:[#allocation2 + $0x12] sm:$0xff] %vm93, %v91
    %103 = vst.msk [vmem:[#allocation2 + $0x1a] sm:$0xff] %vm93, %v92
    %v104 = vld [vmem:[#allocation2] sm:$0xff]
    %v105 = vld [vmem:[#allocation2 + $0x8] sm:$0xff]
    %v106 = vld [vmem:[#allocation2 + $0x10] sm:$0xff]
    %v107 = vld [vmem:[#allocation2 + $0x18] sm:$0xff]
    %v108 = vld [vmem:[#allocation2 + $0x4] sm:$0xff]
    %v109 = vld [vmem:[#allocation2 + $0xc] sm:$0xff]
    %v110 = vld [vmem:[#allocation2 + $0x14] sm:$0xff]
    %v111 = vld [vmem:[#allocation2 + $0x1c] sm:$0xff]
    %116 = vrot.lane.b32.xlu0 %v89, 32
    %v117 = vpop.permute.xlu0 %116
    %118 = vrot.lane.b32.xlu0 %v90, 32
    %v119 = vpop.permute.xlu0 %118
    %120 = vrot.lane.b32.xlu0 %v91, 32
    %v121 = vpop.permute.xlu0 %120
    %122 = vrot.lane.b32.xlu0 %v92, 32
    %v123 = vpop.permute.xlu0 %122
    %132 = vrot.lane.b32.xlu0 %v108, 64
    %v133 = vpop.permute.xlu0 %132
    %134 = vrot.lane.b32.xlu0 %v109, 64
    %v135 = vpop.permute.xlu0 %134
    %136 = vrot.lane.b32.xlu0 %v110, 64
    %v137 = vpop.permute.xlu0 %136
    %138 = vrot.lane.b32.xlu0 %v111, 64
    %v139 = vpop.permute.xlu0 %138
    %v144 = vsel %vm93, %v104, %v117
    %v145 = vsel %vm93, %v105, %v119
    %v146 = vsel %vm93, %v106, %v121
    %v147 = vsel %vm93, %v107, %v123
    %vm148 = vcmask 523264
    %v149 = vsel %vm148, %v144, %v133
    %v150 = vsel %vm148, %v145, %v135
    %v151 = vsel %vm148, %v146, %v137
    %v152 = vsel %vm148, %v147, %v139
    %v153 = vld [vmem:[%s3] sm:$0xff]
    %v154 = vld [vmem:[%s3 + $0x8] sm:$0xff]
    %v155 = vld [vmem:[%s3 + $0x10] sm:$0xff]
    %v156 = vld [vmem:[%s3 + $0x18] sm:$0xff]
    %v157 = vld [vmem:[%s3 + $0x20] sm:$0xff]
    %v158 = vld [vmem:[%s3 + $0x28] sm:$0xff]
    %v159 = vld [vmem:[%s3 + $0x30] sm:$0xff]
    %v160 = vld [vmem:[%s3 + $0x38] sm:$0xff]
    %v161 = vld [vmem:[%s3 + $0x40] sm:$0xff]
    %v162 = vld [vmem:[%s3 + $0x48] sm:$0xff]
    %v163 = vld [vmem:[%s3 + $0x50] sm:$0xff]
    %v164 = vld [vmem:[%s3 + $0x58] sm:$0xff]
    %v165 = vld [vmem:[%s4] sm:$0x1]
    %v167 = vperm.slane %v165, 0
    %vm169 = vcmask 785408
    %v171 = vsel %vm169, %v149, 0
    %v174 = vsel %vm169, %v150, 0
    %v177 = vsel %vm169, %v151, 0
    %v180 = vsel %vm169, %v152, 0
    %182 = vmatpush.msra.mxu0 0.0
    %183 = vmatpush.msra.mxu0 0.0
    %184 = vmatpush.msra.mxu0 0.0
    %185 = vmatpush.msra.mxu0 0.0
    %186 = vmatpush.msra.mxu0 %v164
    %187 = vmatpush.msra.mxu0 %v163
    %188 = vmatpush.msra.mxu0 %v162
    %189 = vmatpush.msra.mxu0 %v161
    %190 = vmatpush.msra.mxu0 %v160
    %191 = vmatpush.msra.mxu0 %v159
    %192 = vmatpush.msra.mxu0 %v158
    %193 = vmatpush.msra.mxu0 %v157
    %194 = vmatpush.msra.mxu0 %v156
    %195 = vmatpush.msra.mxu0 %v155
    %196 = vmatpush.msra.mxu0 %v154
    %197 = vmatpush.msra.mxu0 %v153
    %198 = vmatmul.f32.gmra.mxu0 %v171
    %v199 = vpop.f32.mrf.mxu0
    %v200 = vadd.f32 %v167, %v199
    %201 = vmatmul.f32.gmra.mxu0 %v174
    %v202 = vpop.f32.mrf.mxu0
    %v203 = vadd.f32 %v167, %v202
    %204 = vmatmul.f32.gmra.mxu0 %v177
    %v205 = vpop.f32.mrf.mxu0
    %v206 = vadd.f32 %v167, %v205
    %207 = vmatmul.f32.gmra.mxu0 %v180
    %v208 = vpop.f32.mrf.mxu0
    %v209 = vadd.f32 %v167, %v208
    %210 = vdwg.mxu0
    %v211 = vmax.f32 %v200, 0.0
    %v212 = vmax.f32 %v203, 0.0
    %v213 = vmax.f32 %v206, 0.0
    %v214 = vmax.f32 %v209, 0.0
    %215 = vst.msk [vmem:[#allocation3] sm:$0xff] %vm148, %v211
    %216 = vst.msk [vmem:[#allocation3 + $0x8] sm:$0xff] %vm148, %v212
    %217 = vst.msk [vmem:[#allocation3 + $0x10] sm:$0xff] %vm148, %v213
    %218 = vst.msk [vmem:[#allocation3 + $0x18] sm:$0xff] %vm148, %v214
    %v219 = vld [vmem:[#allocation3] sm:$0x3]
    %v220 = vld [vmem:[#allocation3 + $0x2] sm:$0x3]
    %v221 = vmax.f32 %v219, %v220
    %v222 = vld [vmem:[#allocation3 + $0x4] sm:$0x3]
    %v223 = vld [vmem:[#allocation3 + $0x6] sm:$0x3]
    %v224 = vmax.f32 %v222, %v223
    %v225 = vld [vmem:[#allocation3 + $0x8] sm:$0x3]
    %v226 = vld [vmem:[#allocation3 + $0xa] sm:$0x3]
    %v227 = vmax.f32 %v225, %v226
    %v228 = vld [vmem:[#allocation3 + $0xc] sm:$0x3]
    %v229 = vld [vmem:[#allocation3 + $0xe] sm:$0x3]
    %v230 = vmax.f32 %v228, %v229
    %v231 = vld [vmem:[#allocation3 + $0x10] sm:$0x3]
    %v232 = vld [vmem:[#allocation3 + $0x12] sm:$0x3]
    %v233 = vmax.f32 %v231, %v232
    %v234 = vld [vmem:[#allocation3 + $0x14] sm:$0x3]
    %v235 = vld [vmem:[#allocation3 + $0x16] sm:$0x3]
    %v236 = vmax.f32 %v234, %v235
    %v237 = vld [vmem:[#allocation3 + $0x18] sm:$0x3]
    %v238 = vld [vmem:[#allocation3 + $0x1a] sm:$0x3]
    %v239 = vmax.f32 %v237, %v238
    %v240 = vld [vmem:[#allocation3 + $0x1c] sm:$0x3]
    %v241 = vld [vmem:[#allocation3 + $0x1e] sm:$0x3]
    %v242 = vmax.f32 %v240, %v241
    %244 = vrot.lane.b32.xlu0 %v224, 64
    %v245 = vpop.permute.xlu0 %244
    %248 = vrot.lane.b32.xlu0 %v230, 64
    %v249 = vpop.permute.xlu0 %248
    %252 = vrot.lane.b32.xlu0 %v236, 64
    %v253 = vpop.permute.xlu0 %252
    %256 = vrot.lane.b32.xlu0 %v242, 64
    %v257 = vpop.permute.xlu0 %256
    %v259 = vsel %vm148, %v221, %v245
    %v260 = vsel %vm148, %v227, %v249
    %v261 = vsel %vm148, %v233, %v253
    %v262 = vsel %vm148, %v239, %v257
    %v263 = vld [vmem:[%s5] sm:$0xff]
    %v264 = vld [vmem:[%s5 + $0x8] sm:$0xff]
    %v265 = vld [vmem:[%s5 + $0x10] sm:$0xff]
    %v266 = vld [vmem:[%s5 + $0x18] sm:$0xff]
    %v267 = vld [vmem:[%s5 + $0x20] sm:$0xff]
    %v268 = vld [vmem:[%s5 + $0x28] sm:$0xff]
    %v269 = vld [vmem:[%s5 + $0x30] sm:$0xff]
    %v270 = vld [vmem:[%s5 + $0x38] sm:$0xff]
    %v271 = vld [vmem:[%s5 + $0x40] sm:$0xff]
    %v272 = vld [vmem:[%s5 + $0x48] sm:$0xff]
    %v273 = vld [vmem:[%s5 + $0x50] sm:$0xff]
    %v274 = vld [vmem:[%s5 + $0x58] sm:$0xff]
    %v275 = vld [vmem:[%s5 + $0x60] sm:$0xff]
    %v276 = vld [vmem:[%s5 + $0x68] sm:$0xff]
    %v277 = vld [vmem:[%s5 + $0x70] sm:$0xff]
    %v278 = vld [vmem:[%s5 + $0x78] sm:$0xff]
    %v279 = vld [vmem:[%s5 + $0x80] sm:$0xff]
    %v280 = vld [vmem:[%s5 + $0x88] sm:$0xff]
    %v281 = vld [vmem:[%s5 + $0x90] sm:$0xff]
    %v282 = vld [vmem:[%s5 + $0x98] sm:$0xff]
    %v283 = vld [vmem:[%s5 + $0xa0] sm:$0xff]
    %v284 = vld [vmem:[%s5 + $0xa8] sm:$0xff]
    %v285 = vld [vmem:[%s5 + $0xb0] sm:$0xff]
    %v286 = vld [vmem:[%s5 + $0xb8] sm:$0xff]
    %v287 = vld [vmem:[%s5 + $0xc0] sm:$0xff]
    %v288 = vld [vmem:[%s5 + $0xc8] sm:$0xff]
    %v289 = vld [vmem:[%s5 + $0xd0] sm:$0xff]
    %v290 = vld [vmem:[%s5 + $0xd8] sm:$0xff]
    %v291 = vld [vmem:[%s5 + $0xe0] sm:$0xff]
    %v292 = vld [vmem:[%s5 + $0xe8] sm:$0xff]
    %v293 = vld [vmem:[%s5 + $0xf0] sm:$0xff]
    %v294 = vld [vmem:[%s5 + $0xf8] sm:$0xff]
    %v295 = vld [vmem:[%s5 + $0x100] sm:$0xff]
    %v296 = vld [vmem:[%s5 + $0x108] sm:$0xff]
    %v297 = vld [vmem:[%s5 + $0x110] sm:$0xff]
    %v298 = vld [vmem:[%s5 + $0x118] sm:$0xff]
    %v299 = vld [vmem:[%s5 + $0x120] sm:$0xff]
    %v300 = vld [vmem:[%s5 + $0x128] sm:$0xff]
    %v301 = vld [vmem:[%s5 + $0x130] sm:$0xff]
    %v302 = vld [vmem:[%s5 + $0x138] sm:$0xff]
    %v303 = vld [vmem:[%s5 + $0x140] sm:$0xff]
    %v304 = vld [vmem:[%s5 + $0x148] sm:$0xff]
    %v305 = vld [vmem:[%s5 + $0x150] sm:$0xff]
    %v306 = vld [vmem:[%s5 + $0x158] sm:$0xff]
    %v307 = vld [vmem:[%s5 + $0x160] sm:$0xff]
    %v308 = vld [vmem:[%s5 + $0x168] sm:$0xff]
    %v309 = vld [vmem:[%s5 + $0x170] sm:$0xff]
    %v310 = vld [vmem:[%s5 + $0x178] sm:$0xff]
    %v311 = vld [vmem:[%s5 + $0x180] sm:$0xff]
    %v312 = vld [vmem:[%s5 + $0x188] sm:$0xff]
    %v313 = vld [vmem:[%s5 + $0x190] sm:$0xff]
    %v314 = vld [vmem:[%s5 + $0x198] sm:$0xff]
    %v315 = vld [vmem:[%s5 + $0x1a0] sm:$0xff]
    %v316 = vld [vmem:[%s5 + $0x1a8] sm:$0xff]
    %v317 = vld [vmem:[%s5 + $0x1b0] sm:$0xff]
    %v318 = vld [vmem:[%s5 + $0x1b8] sm:$0xff]
    %v319 = vld [vmem:[%s5 + $0x1c0] sm:$0xff]
    %v320 = vld [vmem:[%s5 + $0x1c8] sm:$0xff]
    %v321 = vld [vmem:[%s5 + $0x1d0] sm:$0xff]
    %v322 = vld [vmem:[%s5 + $0x1d8] sm:$0xff]
    %v323 = vld [vmem:[%s5 + $0x1e0] sm:$0xff]
    %v324 = vld [vmem:[%s5 + $0x1e8] sm:$0xff]
    %v325 = vld [vmem:[%s5 + $0x1f0] sm:$0xff]
    %v326 = vld [vmem:[%s5 + $0x1f8] sm:$0xff]
    %v327 = vld [vmem:[%s6] sm:$0x1]
    %v329 = vperm.slane %v327, 0
    %331 = vmatpush.msra.mxu0 %v278
    %332 = vmatpush.msra.mxu0 %v277
    %333 = vmatpush.msra.mxu0 %v276
    %334 = vmatpush.msra.mxu0 %v275
    %335 = vmatpush.msra.mxu0 %v274
    %336 = vmatpush.msra.mxu0 %v273
    %337 = vmatpush.msra.mxu0 %v272
    %338 = vmatpush.msra.mxu0 %v271
    %339 = vmatpush.msra.mxu0 %v270
    %340 = vmatpush.msra.mxu0 %v269
    %341 = vmatpush.msra.mxu0 %v268
    %342 = vmatpush.msra.mxu0 %v267
    %343 = vmatpush.msra.mxu0 %v266
    %344 = vmatpush.msra.mxu0 %v265
    %345 = vmatpush.msra.mxu0 %v264
    %346 = vmatpush.msra.mxu0 %v263
    %347 = vmatmul.f32.gmra.mxu0 %v259
    %v348 = vpop.f32.mrf.mxu0
    %v349 = vadd.f32 %v329, %v348
    %350 = vdwg.mxu0
    %351 = vmatpush.msra.mxu0 %v294
    %352 = vmatpush.msra.mxu0 %v293
    %353 = vmatpush.msra.mxu0 %v292
    %354 = vmatpush.msra.mxu0 %v291
    %355 = vmatpush.msra.mxu0 %v290
    %356 = vmatpush.msra.mxu0 %v289
    %357 = vmatpush.msra.mxu0 %v288
    %358 = vmatpush.msra.mxu0 %v287
    %359 = vmatpush.msra.mxu0 %v286
    %360 = vmatpush.msra.mxu0 %v285
    %361 = vmatpush.msra.mxu0 %v284
    %362 = vmatpush.msra.mxu0 %v283
    %363 = vmatpush.msra.mxu0 %v282
    %364 = vmatpush.msra.mxu0 %v281
    %365 = vmatpush.msra.mxu0 %v280
    %366 = vmatpush.msra.mxu0 %v279
    %367 = vmatmul.f32.gmra.mxu0 %v260
    %v368 = vpop.f32.mrf.mxu0
    %v369 = vadd.f32 %v349, %v368
    %370 = vdwg.mxu0
    %371 = vmatpush.msra.mxu0 %v310
    %372 = vmatpush.msra.mxu0 %v309
    %373 = vmatpush.msra.mxu0 %v308
    %374 = vmatpush.msra.mxu0 %v307
    %375 = vmatpush.msra.mxu0 %v306
    %376 = vmatpush.msra.mxu0 %v305
    %377 = vmatpush.msra.mxu0 %v304
    %378 = vmatpush.msra.mxu0 %v303
    %379 = vmatpush.msra.mxu0 %v302
    %380 = vmatpush.msra.mxu0 %v301
    %381 = vmatpush.msra.mxu0 %v300
    %382 = vmatpush.msra.mxu0 %v299
    %383 = vmatpush.msra.mxu0 %v298
    %384 = vmatpush.msra.mxu0 %v297
    %385 = vmatpush.msra.mxu0 %v296
    %386 = vmatpush.msra.mxu0 %v295
    %387 = vmatmul.f32.gmra.mxu0 %v261
    %v388 = vpop.f32.mrf.mxu0
    %v389 = vadd.f32 %v369, %v388
    %390 = vdwg.mxu0
    %391 = vmatpush.msra.mxu0 %v326
    %392 = vmatpush.msra.mxu0 %v325
    %393 = vmatpush.msra.mxu0 %v324
    %394 = vmatpush.msra.mxu0 %v323
    %395 = vmatpush.msra.mxu0 %v322
    %396 = vmatpush.msra.mxu0 %v321
    %397 = vmatpush.msra.mxu0 %v320
    %398 = vmatpush.msra.mxu0 %v319
    %399 = vmatpush.msra.mxu0 %v318
    %400 = vmatpush.msra.mxu0 %v317
    %401 = vmatpush.msra.mxu0 %v316
    %402 = vmatpush.msra.mxu0 %v315
    %403 = vmatpush.msra.mxu0 %v314
    %404 = vmatpush.msra.mxu0 %v313
    %405 = vmatpush.msra.mxu0 %v312
    %406 = vmatpush.msra.mxu0 %v311
    %407 = vmatmul.f32.gmra.mxu0 %v262
    %v408 = vpop.f32.mrf.mxu0
    %v409 = vadd.f32 %v389, %v408
    %410 = vdwg.mxu0
    %v411 = vmax.f32 %v409, 0.0
    %v412 = vld [vmem:[%s7] sm:$0xff]
    %v413 = vld [vmem:[%s7 + $0x8] sm:$0xff]
    %v414 = vld [vmem:[%s7 + $0x10] sm:$0xff]
    %v415 = vld [vmem:[%s7 + $0x18] sm:$0xff]
    %v416 = vld [vmem:[%s7 + $0x20] sm:$0xff]
    %v417 = vld [vmem:[%s7 + $0x28] sm:$0xff]
    %v418 = vld [vmem:[%s7 + $0x30] sm:$0xff]
    %v419 = vld [vmem:[%s7 + $0x38] sm:$0xff]
    %v420 = vld [vmem:[%s8] sm:$0x1]
    %v422 = vperm.slane %v420, 0
    %v425 = vsel %vm148, %v411, 0
    %427 = vmatpush.msra.mxu0 0.0
    %428 = vmatpush.msra.mxu0 0.0
    %429 = vmatpush.msra.mxu0 0.0
    %430 = vmatpush.msra.mxu0 0.0
    %431 = vmatpush.msra.mxu0 0.0
    %432 = vmatpush.msra.mxu0 0.0
    %433 = vmatpush.msra.mxu0 0.0
    %434 = vmatpush.msra.mxu0 0.0
    %435 = vmatpush.msra.mxu0 %v419
    %436 = vmatpush.msra.mxu0 %v418
    %437 = vmatpush.msra.mxu0 %v417
    %438 = vmatpush.msra.mxu0 %v416
    %439 = vmatpush.msra.mxu0 %v415
    %440 = vmatpush.msra.mxu0 %v414
    %441 = vmatpush.msra.mxu0 %v413
    %442 = vmatpush.msra.mxu0 %v412
    %443 = vmatmul.f32.gmra.mxu0 %v425
    %v444 = vpop.f32.mrf.mxu0
    %v445 = vadd.f32 %v422, %v444
    %446 = vdwg.mxu0
    %447 = vst [vmem:[#allocation4] sm:$0x3] %v445
    // Predicated region
    $region38: #{tpu_custom_call.1} parent=1 // pred_check
      _
    $region39: #{tpu_custom_call.1} parent=1 // pred_check_branch
      %449 = sbr.rel (0) target = $region41
    $region40: #{tpu_custom_call.1} parent=1 // pred_region
      %451 = vsyncadd [#allocation5], 0
      %s453 = sshll.u32 [#allocation4], 4
      %s454 = int_to_ptr.vmem [resolvable:$true] %s453
      %s455 = sshll.u32 %s9, 4
      %s456 = int_to_ptr.hbm [resolvable:$true] %s455
      %458 = dma.vmem_to_hbm [thread:$0]  %s454, 32, %s456, [#allocation5]
    $region41: #{tpu_custom_call.1} parent=1 // pred_fallthru
      _
    // Predicated region
    $region42: #{tpu_custom_call.1} parent=1 // pred_check
      _
    $region43: #{tpu_custom_call.1} parent=1 // pred_check_branch
      %460 = sbr.rel (0) target = $region45
    $region44: #{tpu_custom_call.1} parent=1 // pred_region
      %462 = dma.done [#allocation5], 32
    $region45: #{tpu_custom_call.1} parent=1 // pred_fallthru
      _
    %463 = vsyncpa [#allocation5], 1

</llo_original>
